<compile_context>
chip_gen: v7x
topology: tpu7x:2x2x1
jax: 0.10.0
libtpu: 0.0.40
codegen_flags: <defaults>
</compile_context>

<pallas_src>
import functools

import jax
import jax.numpy as jnp
from jax.experimental import pallas as pl
from jax.experimental.pallas import tpu as pltpu

_EPS = 1e-6


def _round_up(x, m):
    return (x + m - 1) // m * m


def _cdiv(a, b):
    return (a + b - 1) // b


def _vmem_limit_bytes():
    """Scoped VMEM request: half of per-core physical VMEM, capped at 64 MiB."""
    cap = 64 * 1024 * 1024                       # conservative fallback (v7x per-TC)
    try:
        cap = int(pltpu.get_tpu_info().vmem_capacity_bytes)
    except Exception:
        pass
    return int(min(max(cap // 2, 16 * 1024 * 1024), 64 * 1024 * 1024))


def _pick_hw_tile(hw, n_ch, budget_bytes, *, want_multi=False, batch=1):
    """Largest lane tile (multiple of 128, or the full hw extent) whose
    sublane-padded f32 footprint fits the per-tile byte budget."""
    c_pad = _round_up(max(n_ch, 1), 8)           # channels pad to 8 sublanes
    lanes = max((budget_bytes // (c_pad * 4)) // 128 * 128, 128)
    t = hw if lanes >= hw else lanes
    if want_multi and batch * _cdiv(hw, t) < 2 and hw > 128:
        # v7x megacore: make sure there are >= 2 grid tiles to shard across TCs.
        t = min(hw, max(128, _round_up(_cdiv(hw, 2), 128)))
    return t


def _resolve_hw_tile(hw, n_ch, budget_bytes, override, **kw):
    if override is not None:
        assert override == hw or (override % 128 == 0 and override <= hw), \
            "hw_tile must be a multiple of 128 (or equal H*W)"
        return override
    return _pick_hw_tile(hw, n_ch, budget_bytes, **kw)


# ---------------------------------------------------------------------------
# Streaming per-channel statistics kernel (data-dependent init, large tensors).
# grid = (B, hw_tiles): each step merges a (C, hw_tile) tile's (mean, M2) into
# f32 VMEM accumulators (Chan/Welford merge, no E[x^2]-E[x]^2 cancellation).
# Ragged last lane tile is masked with exact element counts.  Outputs
# (scale, bias, inv_scale) are written once on the last step; their block index
# is constant so they flush to HBM exactly once at grid end (standard P3).
# ---------------------------------------------------------------------------
def _actnorm_stats_kernel(hw, hw_tile, n_total,
                          x_ref, scale_ref, bias_ref, inv_scale_ref,
                          mean_acc, m2_acc):
    b = pl.program_id(0)
    j = pl.program_id(1)
    is_first = jnp.logical_and(b == 0, j == 0)
    is_last = jnp.logical_and(b == pl.num_programs(0) - 1,
                              j == pl.num_programs(1) - 1)

    @pl.when(is_first)
    def _init():
        mean_acc[...] = jnp.zeros_like(mean_acc)
        m2_acc[...] = jnp.zeros_like(m2_acc)

    x = x_ref[...].astype(jnp.float32)                     # (C, hw_tile)
    # Mask the (possibly ragged) tail of the last lane tile of each image.
    col = jax.lax.broadcasted_iota(jnp.int32, x.shape, 1)
    valid = hw - j * hw_tile                               # exact int32 count
    mask = col < valid
    cnt = jnp.maximum(jnp.minimum(valid, hw_tile).astype(jnp.float32), 1.0)

    tile_sum = jnp.sum(jnp.where(mask, x, 0.0), axis=1, keepdims=True)   # (C, 1)
    tile_mean = tile_sum / cnt
    d = x - tile_mean
    tile_m2 = jnp.sum(jnp.where(mask, d * d, 0.0), axis=1, keepdims=True)

    # Chan/Welford parallel merge; element counts are exact integers, cast to
    # f32 only to form the merge ratios.
    n_prev = (b * hw + j * hw_tile).astype(jnp.float32)
    n_new = n_prev + cnt
    delta = tile_mean - mean_acc[...]
    mean_acc[...] = mean_acc[...] + delta * (cnt / n_new)
    m2_acc[...] = m2_acc[...] + tile_m2 + delta * delta * (n_prev * cnt / n_new)

    @pl.when(is_last)
    def _finalize():
        mean = mean_acc[...]
        var = jnp.maximum(m2_acc[...] * (1.0 / n_total), 0.0)
        scl = jnp.sqrt(var) + _EPS                         # biased std + eps
        bias_ref[...] = mean.astype(bias_ref.dtype)
        scale_ref[...] = scl.astype(scale_ref.dtype)
        inv_scale_ref[...] = (1.0 / scl).astype(inv_scale_ref.dtype)


def actnorm_stats(x3d, *, hw_tile=None, vmem_limit=None):
    """x3d: (B, C, H*W). Returns (scale, bias, inv_scale), each (C, 1) f32."""
    B, C, hw = x3d.shape
    vmem_limit = vmem_limit or _vmem_limit_bytes()
    t = _resolve_hw_tile(hw, C, vmem_limit // 8, hw_tile)
    nt = _cdiv(hw, t)
    kernel = functools.partial(_actnorm_stats_kernel, hw, t, float(B * hw))
    grid_spec = pltpu.PrefetchScalarGridSpec(
        num_scalar_prefetch=0,
        grid=(B, nt),
        in_specs=[pl.BlockSpec((None, C, t), lambda b, j: (b, 0, j))],
        out_specs=(pl.BlockSpec((C, 1), lambda b, j: (0, 0)),
                   pl.BlockSpec((C, 1), lambda b, j: (0, 0)),
                   pl.BlockSpec((C, 1), lambda b, j: (0, 0))),
        scratch_shapes=[pltpu.VMEM((C, 1), jnp.float32),     # running mean
                        pltpu.VMEM((C, 1), jnp.float32)],    # running M2
    )
    return pl.pallas_call(
        kernel,
        out_shape=(jax.ShapeDtypeStruct((C, 1), jnp.float32),
                   jax.ShapeDtypeStruct((C, 1), jnp.float32),
                   jax.ShapeDtypeStruct((C, 1), jnp.float32)),
        grid_spec=grid_spec,
        compiler_params=pltpu.CompilerParams(
            dimension_semantics=("arbitrary", "arbitrary"),   # sequential reduction
            vmem_limit_bytes=vmem_limit),
    )(x3d)


# ---------------------------------------------------------------------------
# Apply kernel (also the post-init forward path).  Pure lane-dense streaming
# elementwise: (C, hw_tile) tiles, (C, 1) params resident in VMEM and
# broadcast across lanes.  Both grid axes are parallel (megacore on v7x).
# ---------------------------------------------------------------------------
def _actnorm_apply_kernel(x_ref, bias_ref, inv_scale_ref, z_ref):
    z_ref[...] = ((x_ref[...] - bias_ref[...]) * inv_scale_ref[...]).astype(z_ref.dtype)


def actnorm_apply(x3d, bias, inv_scale, *, hw_tile=None, vmem_limit=None):
    """x3d: (B, C, H*W); bias/inv_scale: (C, 1). Returns z3d (B, C, H*W)."""
    B, C, hw = x3d.shape
    vmem_limit = vmem_limit or _vmem_limit_bytes()
    t = _resolve_hw_tile(hw, C, vmem_limit // 8, hw_tile, want_multi=True, batch=B)
    nt = _cdiv(hw, t)
    grid_spec = pltpu.PrefetchScalarGridSpec(
        num_scalar_prefetch=0,
        grid=(B, nt),
        in_specs=[pl.BlockSpec((None, C, t), lambda b, j: (b, 0, j)),
                  pl.BlockSpec((C, 1), lambda b, j: (0, 0)),   # params stay resident
                  pl.BlockSpec((C, 1), lambda b, j: (0, 0))],
        out_specs=pl.BlockSpec((None, C, t), lambda b, j: (b, 0, j)),
    )
    return pl.pallas_call(
        _actnorm_apply_kernel,
        out_shape=jax.ShapeDtypeStruct(x3d.shape, x3d.dtype),
        grid_spec=grid_spec,
        compiler_params=pltpu.CompilerParams(
            dimension_semantics=("parallel", "parallel"),
            vmem_limit_bytes=vmem_limit),
    )(x3d, bias, inv_scale)


# ---------------------------------------------------------------------------
# Fused single-read init kernel for slabs that comfortably fit VMEM:
# x is read from HBM exactly once (1R + 1W instead of the streaming 2R + 1W).
# ---------------------------------------------------------------------------
def _actnorm_init_small_kernel(inv_n, x_ref, z_ref, scale_ref, bias_ref):
    x = x_ref[...].astype(jnp.float32)                                    # (B, C, HW)
    s = jnp.sum(jnp.sum(x, axis=2, keepdims=True), axis=0, keepdims=True)  # (1, C, 1)
    mean = s * inv_n
    d = x - mean
    m2 = jnp.sum(jnp.sum(d * d, axis=2, keepdims=True), axis=0, keepdims=True)
    scl = jnp.sqrt(jnp.maximum(m2 * inv_n, 0.0)) + _EPS                   # biased std
    z_ref[...] = (d * (1.0 / scl)).astype(z_ref.dtype)
    bias_ref[...] = mean[0].astype(bias_ref.dtype)                        # (C, 1)
    scale_ref[...] = scl[0].astype(scale_ref.dtype)


def actnorm_init_small(x3d, *, vmem_limit=None):
    B, C, hw = x3d.shape
    vmem_limit = vmem_limit or _vmem_limit_bytes()
    kernel = functools.partial(_actnorm_init_small_kernel, 1.0 / float(B * hw))
    grid_spec = pltpu.PrefetchScalarGridSpec(
        num_scalar_prefetch=0,
        grid=(1,),
        in_specs=[pl.BlockSpec((B, C, hw), lambda i: (0, 0, 0))],
        out_specs=(pl.BlockSpec((B, C, hw), lambda i: (0, 0, 0)),
                   pl.BlockSpec((C, 1), lambda i: (0, 0)),
                   pl.BlockSpec((C, 1), lambda i: (0, 0))),
    )
    return pl.pallas_call(
        kernel,
        out_shape=(jax.ShapeDtypeStruct(x3d.shape, x3d.dtype),
                   jax.ShapeDtypeStruct((C, 1), jnp.float32),
                   jax.ShapeDtypeStruct((C, 1), jnp.float32)),
        grid_spec=grid_spec,
        compiler_params=pltpu.CompilerParams(
            dimension_semantics=("arbitrary",),
            vmem_limit_bytes=vmem_limit),
    )(x3d)


def glow_actnorm_forward(x, scale=None, bias=None, initialized=False, *, hw_tile=None):
    """Mirrors Actnorm.forward for NCHW x. Returns ((z, logdet), scale, bias);
    scale/bias use the PyTorch param_dim layout (1, C, 1, 1)."""
    B, C, H, W = x.shape
    hw = H * W
    x3d = x.reshape(B, C, hw)            # free: NCHW is contiguous, no transpose
    vmem_limit = _vmem_limit_bytes()

    if not initialized:
        # Sublane/lane-padded f32 footprint of the whole slab.
        slab_padded = B * _round_up(C, 8) * _round_up(hw, 128) * 4
        if hw_tile is None and slab_padded * 10 <= vmem_limit:
            # Whole slab fits comfortably: single-read fused init + apply.
            z3d, scale_c, bias_c = actnorm_init_small(x3d, vmem_limit=vmem_limit)
        else:
            # Streaming: Chan-merged stats pass + lane-dense apply pass.
            scale_c, bias_c, inv_c = actnorm_stats(x3d, hw_tile=hw_tile,
                                                   vmem_limit=vmem_limit)
            z3d = actnorm_apply(x3d, bias_c, inv_c, hw_tile=hw_tile,
                                vmem_limit=vmem_limit)
        scale = scale_c.reshape(1, C, 1, 1)
        bias = bias_c.reshape(1, C, 1, 1)
    else:
        # bf16 inputs keep bf16 apply math on bf16-capable VPUs; f32 stays f32.
        pdt = x.dtype if x.dtype == jnp.bfloat16 else jnp.float32
        bias_c = bias.astype(jnp.float32).reshape(C, 1).astype(pdt)
        inv_c = (1.0 / scale.astype(jnp.float32).reshape(C, 1)).astype(pdt)
        z3d = actnorm_apply(x3d, bias_c, inv_c, hw_tile=hw_tile,
                            vmem_limit=vmem_limit)

    # Free reshape back to NCHW (downstream Glow ops could equally consume the
    # (B, C, H*W) slab directly; this wrapper mirrors Actnorm.forward's API).
    z = z3d.reshape(B, C, H, W)
    # Scalar logdet from the tiny (1,C,1,1) params: no lane-width-1 column
    # output streams through the kernel store path.
    logdet = -jnp.sum(jnp.log(jnp.abs(scale.astype(jnp.float32)))) * (H * W)
    return (z, logdet), scale, bias


if __name__ == "__main__":
    key = jax.random.PRNGKey(0)

    def reference(x):
        mean = jnp.mean(x, axis=(0, 2, 3))
        std = jnp.std(x, axis=(0, 2, 3))             # biased, torch .std(1, False)
        scl = std + _EPS
        z = (x - mean[None, :, None, None]) / scl[None, :, None, None]
        logdet = -jnp.sum(jnp.log(jnp.abs(scl))) * (x.shape[2] * x.shape[3])
        return z, scl, mean, logdet

    k1, k2 = jax.random.split(key)

    # --- Case 1: small slab -> fused single-read init path, then apply-only path.
    B, C, H, W = 2, 8, 16, 16
    x = jax.random.normal(k1, (B, C, H, W), dtype=jnp.float32) * 1.5 + 0.3
    (z, logdet), scale, bias = glow_actnorm_forward(x, initialized=False)
    jax.block_until_ready((z, logdet, scale, bias))
    z_want, scale_want, mean_want, logdet_want = reference(x)
    assert jnp.allclose(bias.reshape(-1), mean_want, atol=1e-5, rtol=1e-5)
    assert jnp.allclose(scale.reshape(-1), scale_want, atol=1e-5, rtol=1e-5)
    assert jnp.allclose(z, z_want, atol=1e-4, rtol=1e-4)
    assert jnp.allclose(logdet, logdet_want, atol=1e-3, rtol=1e-5)

    (z2, logdet2), _, _ = glow_actnorm_forward(x, scale, bias, initialized=True)
    jax.block_until_ready((z2, logdet2))
    assert jnp.allclose(z2, z_want, atol=1e-4, rtol=1e-4)
    assert jnp.allclose(logdet2, logdet_want, atol=1e-3, rtol=1e-5)

    # --- Case 2: forced 128-lane tiles -> streaming stats (Chan merge) + apply,
    #     with a ragged last lane tile (H*W = 144 -> tiles of 128 + 16).
    B, C, H, W = 2, 4, 12, 12
    x = jax.random.normal(k2, (B, C, H, W), dtype=jnp.float32) * 0.7 - 1.2
    (z3, logdet3), scale3, bias3 = glow_actnorm_forward(x, initialized=False,
                                                        hw_tile=128)
    jax.block_until_ready((z3, logdet3, scale3, bias3))
    z_want, scale_want, mean_want, logdet_want = reference(x)
    assert jnp.allclose(bias3.reshape(-1), mean_want, atol=1e-5, rtol=1e-5)
    assert jnp.allclose(scale3.reshape(-1), scale_want, atol=1e-5, rtol=1e-5)
    assert jnp.allclose(z3, z_want, atol=1e-4, rtol=1e-4)
    assert jnp.allclose(logdet3, logdet_want, atol=1e-3, rtol=1e-5)

    (z4, logdet4), _, _ = glow_actnorm_forward(x, scale3, bias3, initialized=True,
                                               hw_tile=128)
    jax.block_until_ready((z4, logdet4))
    assert jnp.allclose(z4, z_want, atol=1e-4, rtol=1e-4)

    print("KERNEL_OK")
</pallas_src>

<mosaic_0001>
module attributes {stable_mosaic.version = 11 : i64} {
  func.func @_actnorm_init_small_kernel(%arg0: i32, %arg1: memref<2x8x256xf32, #tpu.memory_space<vmem>>, %arg2: memref<2x8x256xf32, #tpu.memory_space<vmem>>, %arg3: memref<8x1xf32, #tpu.memory_space<vmem>>, %arg4: memref<8x1xf32, #tpu.memory_space<vmem>>) attributes {dimension_semantics = [#tpu.dimension_semantics<arbitrary>], iteration_bounds = array<i64: 1>, scalar_prefetch = 0 : i64, scratch_operands = 0 : i64, tpu.core_type = #tpu.core_type<tc>, window_params = [{pipeline_mode = #tpu.pipeline_mode<synchronous>, transform_indices = @transform_0, window_bounds = array<i64: 2, 8, 256>}, {pipeline_mode = #tpu.pipeline_mode<synchronous>, transform_indices = @transform_1, window_bounds = array<i64: 2, 8, 256>}, {pipeline_mode = #tpu.pipeline_mode<synchronous>, transform_indices = @transform_2, window_bounds = array<i64: 8, 1>}, {pipeline_mode = #tpu.pipeline_mode<synchronous>, transform_indices = @transform_3, window_bounds = array<i64: 8, 1>}]} {
    %c0 = arith.constant 0 : index
    %c0_0 = arith.constant 0 : index
    %c0_1 = arith.constant 0 : index
    %0 = vector.load %arg1[%c0, %c0_0, %c0_1] : memref<2x8x256xf32, #tpu.memory_space<vmem>>, vector<2x8x256xf32>
    %cst = arith.constant dense<0.000000e+00> : vector<2x8xf32>
    %1 = vector.multi_reduction <add>, %0, %cst [2] : vector<2x8x256xf32> to vector<2x8xf32>
    %2 = vector.shape_cast %1 : vector<2x8xf32> to vector<2x8x1xf32>
    %cst_2 = arith.constant dense<0.000000e+00> : vector<8x1xf32>
    %3 = vector.multi_reduction <add>, %2, %cst_2 [0] : vector<2x8x1xf32> to vector<8x1xf32>
    %4 = vector.shape_cast %3 : vector<8x1xf32> to vector<1x8x1xf32>
    %cst_3 = arith.constant 0.001953125 : f32
    %5 = vector.broadcast %cst_3 : f32 to vector<1x8x1xf32>
    %6 = arith.mulf %4, %5 : vector<1x8x1xf32>
    %7 = vector.broadcast %6 : vector<1x8x1xf32> to vector<2x8x256xf32>
    %8 = arith.subf %0, %7 : vector<2x8x256xf32>
    %9 = arith.mulf %8, %8 : vector<2x8x256xf32>
    %cst_4 = arith.constant dense<0.000000e+00> : vector<2x8xf32>
    %10 = vector.multi_reduction <add>, %9, %cst_4 [2] : vector<2x8x256xf32> to vector<2x8xf32>
    %11 = vector.shape_cast %10 : vector<2x8xf32> to vector<2x8x1xf32>
    %cst_5 = arith.constant dense<0.000000e+00> : vector<8x1xf32>
    %12 = vector.multi_reduction <add>, %11, %cst_5 [0] : vector<2x8x1xf32> to vector<8x1xf32>
    %13 = vector.shape_cast %12 : vector<8x1xf32> to vector<1x8x1xf32>
    %cst_6 = arith.constant 0.001953125 : f32
    %14 = vector.broadcast %cst_6 : f32 to vector<1x8x1xf32>
    %15 = arith.mulf %13, %14 : vector<1x8x1xf32>
    %cst_7 = arith.constant 0.000000e+00 : f32
    %16 = vector.broadcast %cst_7 : f32 to vector<1x8x1xf32>
    %17 = arith.maximumf %15, %16 : vector<1x8x1xf32>
    %18 = math.sqrt %17 : vector<1x8x1xf32>
    %cst_8 = arith.constant 9.99999997E-7 : f32
    %19 = vector.broadcast %cst_8 : f32 to vector<1x8x1xf32>
    %20 = arith.addf %18, %19 : vector<1x8x1xf32>
    %cst_9 = arith.constant 1.000000e+00 : f32
    %21 = vector.broadcast %cst_9 : f32 to vector<1x8x1xf32>
    %22 = arith.divf %21, %20 : vector<1x8x1xf32>
    %23 = vector.broadcast %22 : vector<1x8x1xf32> to vector<2x8x256xf32>
    %24 = arith.mulf %8, %23 : vector<2x8x256xf32>
    %c0_10 = arith.constant 0 : index
    %c0_11 = arith.constant 0 : index
    %c0_12 = arith.constant 0 : index
    %25 = vector.load %arg2[%c0_10, %c0_11, %c0_12] : memref<2x8x256xf32, #tpu.memory_space<vmem>>, vector<2x8x256xf32>
    tpu.vector_store %arg2[%c0_10, %c0_11, %c0_12], %24 {strides = array<i32>} : memref<2x8x256xf32, #tpu.memory_space<vmem>>, vector<2x8x256xf32>,
    %26 = vector.shape_cast %6 : vector<1x8x1xf32> to vector<8x1xf32>
    %c0_13 = arith.constant 0 : index
    %c0_14 = arith.constant 0 : index
    %27 = vector.load %arg4[%c0_13, %c0_14] : memref<8x1xf32, #tpu.memory_space<vmem>>, vector<8x1xf32>
    tpu.vector_store %arg4[%c0_13, %c0_14], %26 {strides = array<i32>} : memref<8x1xf32, #tpu.memory_space<vmem>>, vector<8x1xf32>,
    %28 = vector.shape_cast %20 : vector<1x8x1xf32> to vector<8x1xf32>
    %c0_15 = arith.constant 0 : index
    %c0_16 = arith.constant 0 : index
    %29 = vector.load %arg3[%c0_15, %c0_16] : memref<8x1xf32, #tpu.memory_space<vmem>>, vector<8x1xf32>
    tpu.vector_store %arg3[%c0_15, %c0_16], %28 {strides = array<i32>} : memref<8x1xf32, #tpu.memory_space<vmem>>, vector<8x1xf32>,
    return
  }
  func.func @transform_0(%arg0: i32) -> (i32, i32, i32) {
    %c0_i32 = arith.constant 0 : i32
    %c0_i32_0 = arith.constant 0 : i32
    %c0_i32_1 = arith.constant 0 : i32
    %c0_i32_2 = arith.constant 0 : i32
    return %c0_i32, %c0_i32_0, %c0_i32_1 : i32, i32, i32
  }
  func.func @transform_1(%arg0: i32) -> (i32, i32, i32) {
    %c0_i32 = arith.constant 0 : i32
    %c0_i32_0 = arith.constant 0 : i32
    %c0_i32_1 = arith.constant 0 : i32
    %c0_i32_2 = arith.constant 0 : i32
    return %c0_i32, %c0_i32_0, %c0_i32_1 : i32, i32, i32
  }
  func.func @transform_2(%arg0: i32) -> (i32, i32) {
    %c0_i32 = arith.constant 0 : i32
    %c0_i32_0 = arith.constant 0 : i32
    %c0_i32_1 = arith.constant 0 : i32
    return %c0_i32, %c0_i32_0 : i32, i32
  }
  func.func @transform_3(%arg0: i32) -> (i32, i32) {
    %c0_i32 = arith.constant 0 : i32
    %c0_i32_0 = arith.constant 0 : i32
    %c0_i32_1 = arith.constant 0 : i32
    return %c0_i32, %c0_i32_0 : i32, i32
  }
}

</mosaic_0001>

<llo_original>
// kernel: tpu_custom_call.1
$region0: #{tpu_custom_call.1}
  #allocation0 [shape = 'u32[]', space=smem, size = 0x4, offset = 0x4, fixed_abs, tag = 'smem constant byte address 0x4 - core index']
  #allocation1 [shape = 'u32[144,128]{1,0:T(1,128)}', space=vmem, size = 0x12000, scoped, tag = 'internal scratch']
  %s0 = inlined_call_operand.hbm [shape: f32[2,8,256], index: 0, kind: input, shape index: {}]
  %s1 = inlined_call_operand.hbm [shape: f32[2,8,256], index: 1, kind: output, shape index: {0}]
  %s2 = inlined_call_operand.vmem [shape: f32[8,1], index: 2, kind: output, shape index: {1}]
  %s3 = inlined_call_operand.vmem [shape: f32[8,1], index: 3, kind: output, shape index: {2}]
  %4 = xla_tuple %s1, %s2, %s3
  %s5 = sld [smem:[#allocation0]]
  $region34: #{tpu_custom_call.1} parent=0
    _
  %s7 = ssub.s32 1, %s5
  %s8 = scalar_select 0, %s7, %s5
  $region1: #{tpu_custom_call.1} parent=0
    #allocation2 [shape = 'u8[16384]{0}', space=vmem, size = 0x4000, scoped, tag = 'input window, operand 0, single buffered']
    #allocation3 [shape = 's32[1]{0}', space=sflag, size = 0x4, scoped, tag = 'scoped memory for tpu_custom_call.1']
    #allocation4 [shape = 's32[1]{0}', space=sflag, size = 0x4, scoped, tag = 'scoped memory for tpu_custom_call.1']
    #allocation5 [shape = 'u8[16384]{0}', space=vmem, size = 0x4000, scoped, tag = 'output window, operand 0, single buffered']
    %9 = vsyncpa [#allocation3], 0
    %10 = vsyncpa [#allocation4], 0
    // Predicated region
    $region2: #{tpu_custom_call.1} parent=1 // pred_check
      _
    $region3: #{tpu_custom_call.1} parent=1 // pred_check_branch
      %12 = sbr.rel (0) target = $region5
    $region4: #{tpu_custom_call.1} parent=1 // pred_region
      %s14 = ssub.s32 512, 512
      %15 = vsyncadd [#allocation3], %s14
      %s16 = sshll.u32 [#allocation2], 4
      %s17 = int_to_ptr.vmem [resolvable:$true] %s16
      %22 = dma.hbm_to_vmem [thread:$0]  %s0, 512, %s17, [#allocation3], 256, 256, 16
    $region5: #{tpu_custom_call.1} parent=1 // pred_fallthru
      _
    // Predicated region
    $region6: #{tpu_custom_call.1} parent=1 // pred_check
      _
    $region7: #{tpu_custom_call.1} parent=1 // pred_check_branch
      %24 = sbr.rel (0) target = $region9
    $region8: #{tpu_custom_call.1} parent=1 // pred_region
      %25 = dma.done [#allocation3], 512
    $region9: #{tpu_custom_call.1} parent=1 // pred_fallthru
      _
    %v26 = vld [vmem:[#allocation2] sm:$0xff]
    %v27 = vld [vmem:[#allocation2 + $0x8] sm:$0xff]
    %v28 = vld [vmem:[#allocation2 + $0x10] sm:$0xff]
    %v29 = vld [vmem:[#allocation2 + $0x18] sm:$0xff]
    %v30 = vadd.f32 %v26, %v27
    %31 = vadd.xlane.f32.xlu0 %v30
    %v32 = vpop.xlane.xlu0 %31
    %v33 = vadd.f32 %v28, %v29
    %34 = vadd.xlane.f32.xlu0 %v33
    %v35 = vpop.xlane.xlu0 %34
    %v36 = vadd.f32 %v32, %v35
    %v37 = vmul.f32 %v36, 0.001953125
    %v38 = vsub.f32 %v26, %v37
    %v39 = vsub.f32 %v27, %v37
    %v40 = vsub.f32 %v28, %v37
    %v41 = vsub.f32 %v29, %v37
    %v42 = vmul.f32 %v38, %v38
    %v43 = vmul.f32 %v39, %v39
    %v44 = vmul.f32 %v40, %v40
    %v45 = vmul.f32 %v41, %v41
    %v46 = vadd.f32 %v42, %v43
    %47 = vadd.xlane.f32.xlu0 %v46
    %v48 = vpop.xlane.xlu0 %47
    %v49 = vadd.f32 %v44, %v45
    %50 = vadd.xlane.f32.xlu0 %v49
    %v51 = vpop.xlane.xlu0 %50
    %v52 = vadd.f32 %v48, %v51
    %v53 = vmul.f32 %v52, 0.001953125
    %v54 = vmax.f32 %v53, 0.0
    %v55 = vrsqrt.pop %v54
    %v56 = vmul.f32 %v54, %v55
    %vm57 = vcmp.eq.f32.partialorder %v54, inf
    %v58 = vsel %vm57, %v54, %v56
    %vm59 = vcmp.eq.f32.partialorder %v54, 0.0
    %v60 = vand.u32 %v54, 2147483648
    %v61 = vsel %vm59, %v60, %v58
    %v62 = vadd.f32 %v61, 1e-06
    %v63 = vrcp.pop %v62
    %v64 = vmul.f32 1.0, %v63
    %v65 = vmul.f32 %v38, %v64
    %v66 = vmul.f32 %v39, %v64
    %v67 = vmul.f32 %v40, %v64
    %v68 = vmul.f32 %v41, %v64
    %69 = vst [vmem:[#allocation5] sm:$0xff] %v65
    %70 = vst [vmem:[#allocation5 + $0x8] sm:$0xff] %v66
    %71 = vst [vmem:[#allocation5 + $0x10] sm:$0xff] %v67
    %72 = vst [vmem:[#allocation5 + $0x18] sm:$0xff] %v68
    %vm73 = vcmask 7168
    %74 = vst.msk [vmem:[%s3] sm:$0xff] %vm73, %v37
    %75 = vst.msk [vmem:[%s2] sm:$0xff] %vm73, %v62
    // Predicated region
    $region10: #{tpu_custom_call.1} parent=1 // pred_check
      _
    $region11: #{tpu_custom_call.1} parent=1 // pred_check_branch
      %77 = sbr.rel (0) target = $region13
    $region12: #{tpu_custom_call.1} parent=1 // pred_region
      %s79 = ssub.s32 512, 512
      %80 = vsyncadd [#allocation4], %s79
      %s81 = sshll.u32 [#allocation5], 4
      %s82 = int_to_ptr.vmem [resolvable:$true] %s81
      %87 = dma.vmem_to_hbm [thread:$0]  %s82, 512, %s1, [#allocation4], 256, 256, 16
    $region13: #{tpu_custom_call.1} parent=1 // pred_fallthru
      _
    // Predicated region
    $region14: #{tpu_custom_call.1} parent=1 // pred_check
      _
    $region15: #{tpu_custom_call.1} parent=1 // pred_check_branch
      %89 = sbr.rel (0) target = $region17
    $region16: #{tpu_custom_call.1} parent=1 // pred_region
      _
    $region17: #{tpu_custom_call.1} parent=1 // pred_fallthru
      _
    // Predicated region
    $region18: #{tpu_custom_call.1} parent=1 // pred_check
      _
    $region19: #{tpu_custom_call.1} parent=1 // pred_check_branch
      %91 = sbr.rel (0) target = $region21
    $region20: #{tpu_custom_call.1} parent=1 // pred_region
      _
    $region21: #{tpu_custom_call.1} parent=1 // pred_fallthru
      _
    // Predicated region
    $region22: #{tpu_custom_call.1} parent=1 // pred_check
      _
    $region23: #{tpu_custom_call.1} parent=1 // pred_check_branch
      %93 = sbr.rel (0) target = $region25
    $region24: #{tpu_custom_call.1} parent=1 // pred_region
      %94 = dma.done [#allocation4], 512
    $region25: #{tpu_custom_call.1} parent=1 // pred_fallthru
      _
    // Predicated region
    $region26: #{tpu_custom_call.1} parent=1 // pred_check
      _
    $region27: #{tpu_custom_call.1} parent=1 // pred_check_branch
      %96 = sbr.rel (0) target = $region29
    $region28: #{tpu_custom_call.1} parent=1 // pred_region
      _
    $region29: #{tpu_custom_call.1} parent=1 // pred_fallthru
      _
    // Predicated region
    $region30: #{tpu_custom_call.1} parent=1 // pred_check
      _
    $region31: #{tpu_custom_call.1} parent=1 // pred_check_branch
      %98 = sbr.rel (0) target = $region33
    $region32: #{tpu_custom_call.1} parent=1 // pred_region
      _
    $region33: #{tpu_custom_call.1} parent=1 // pred_fallthru
      _
    %99 = vsyncpa [#allocation3], 1
    %100 = vsyncpa [#allocation4], 1

</llo_original>
